<compile_context>
chip_gen: v5e
topology: v5e:2x2
jax: 0.10.0
libtpu: 0.0.40
codegen_flags: <defaults>
</compile_context>

<pallas_src>
import math

import jax
import jax.numpy as jnp
from jax.experimental import pallas as pl
from jax.experimental.pallas import tpu as pltpu


def _round_up(n, m):
    return ((n + m - 1) // m) * m


def dqn_kernel(x_ref,
               w1_ref, b1_ref,
               w2_ref, b2_ref,
               w3_ref, b3_ref,
               w4_ref, b4_ref,
               o_ref):
    """One batch tile of the 4-layer MLP. Weights are bf16, (in, out)-major;
    dots accumulate in f32 on the MXU; elementwise ops stay in f32; the final
    result is rounded to bf16 only at the store."""
    h = x_ref[...]
    h = jnp.dot(h.astype(jnp.bfloat16), w1_ref[...],
                preferred_element_type=jnp.float32) + b1_ref[...]
    h = jnp.maximum(h, 0.0)
    h = jnp.dot(h.astype(jnp.bfloat16), w2_ref[...],
                preferred_element_type=jnp.float32) + b2_ref[...]
    h = jnp.maximum(h, 0.0)
    h = jnp.dot(h.astype(jnp.bfloat16), w3_ref[...],
                preferred_element_type=jnp.float32) + b3_ref[...]
    h = jnp.maximum(h, 0.0)
    h = jnp.dot(h.astype(jnp.bfloat16), w4_ref[...],
                preferred_element_type=jnp.float32) + b4_ref[...]
    o_ref[...] = h.astype(o_ref.dtype)


def _choose_batch_tiling(B, *, max_tb=1024):
    """Tile count first, tile size second: >=2 tiles for B>64 (v7x megacore),
    <=max_tb rows per tile, 8-row sublane granularity, minimal padding."""
    if B <= 64:
        n_tiles = 1
    else:
        n_tiles = max(2, pl.cdiv(B, max_tb))
    tb = _round_up(pl.cdiv(B, n_tiles), 8)
    return n_tiles, tb


def dqn_forward(x, params):
    """x: (B, inputs) float32 (unpadded). params: from init_params.
    Returns (B, outputs) float32."""
    B, f_in = x.shape
    in_dim, h1 = params["w1"].shape
    assert f_in == in_dim, f"x feature dim {f_in} != w1 input dim {in_dim}"
    h2 = params["w2"].shape[1]
    h3 = params["w3"].shape[1]
    out_pad = params["w4"].shape[1]
    n_out = params["n_out"]

    n_tiles, tb = _choose_batch_tiling(B)
    b_pad = n_tiles * tb

    # Only the batch axis is (lightly) padded; the feature axis is untouched.
    if b_pad != B:
        x_p = jnp.zeros((b_pad, f_in), x.dtype).at[:B].set(x)
    else:
        x_p = x

    out = pl.pallas_call(
        dqn_kernel,
        out_shape=jax.ShapeDtypeStruct((b_pad, out_pad), jnp.bfloat16),
        grid_spec=pltpu.PrefetchScalarGridSpec(
            num_scalar_prefetch=0,
            grid=(n_tiles,),
            in_specs=[
                pl.BlockSpec((tb, f_in), lambda i: (i, 0)),    # x tile (streamed)
                pl.BlockSpec((f_in, h1), lambda i: (0, 0)),    # weights stay resident
                pl.BlockSpec((1, h1), lambda i: (0, 0)),
                pl.BlockSpec((h1, h2), lambda i: (0, 0)),
                pl.BlockSpec((1, h2), lambda i: (0, 0)),
                pl.BlockSpec((h2, h3), lambda i: (0, 0)),
                pl.BlockSpec((1, h3), lambda i: (0, 0)),
                pl.BlockSpec((h3, out_pad), lambda i: (0, 0)),
                pl.BlockSpec((1, out_pad), lambda i: (0, 0)),
            ],
            out_specs=pl.BlockSpec((tb, out_pad), lambda i: (i, 0)),
        ),
        compiler_params=pltpu.CompilerParams(
            dimension_semantics=("parallel",)),  # shard batch tiles across TCs (v7x)
    )(x_p,
      params["w1"], params["b1"],
      params["w2"], params["b2"],
      params["w3"], params["b3"],
      params["w4"], params["b4"])
    return out[:B, :n_out].astype(jnp.float32)


def init_params(key, inputs, outputs):
    """PyTorch nn.Linear-style init: U(-1/sqrt(fan_in), 1/sqrt(fan_in)).
    Weights are stored transposed vs. PyTorch, i.e. (in, out). Layer 1 keeps
    its real input width (x is passed unpadded); all output dims and the later
    layers' input dims are zero-padded to 128-lane multiples. Weights bf16,
    biases f32. Returns (kernel_params, ref_params_f32)."""
    real_dims = [(inputs, 180), (180, 360), (360, 180), (180, outputs)]
    kparams = {"n_out": outputs}
    rparams = {}
    for i, (fi, fo) in enumerate(real_dims, start=1):
        key, kw, kb = jax.random.split(key, 3)
        bound = 1.0 / math.sqrt(fi)
        w = jax.random.uniform(kw, (fi, fo), jnp.float32, minval=-bound, maxval=bound)
        b = jax.random.uniform(kb, (1, fo), jnp.float32, minval=-bound, maxval=bound)
        rparams[f"w{i}"], rparams[f"b{i}"] = w, b
        fi_p = fi if i == 1 else _round_up(fi, 128)   # K of layer 1 matches raw x
        fo_p = _round_up(fo, 128)
        kparams[f"w{i}"] = (jnp.zeros((fi_p, fo_p), jnp.bfloat16)
                            .at[:fi, :fo].set(w.astype(jnp.bfloat16)))
        kparams[f"b{i}"] = jnp.zeros((1, fo_p), jnp.float32).at[:, :fo].set(b)
    return kparams, rparams


def dqn_reference_f32(x, p):
    """Exact f32 PyTorch-semantics reference (unpadded weights)."""
    h = jnp.maximum(x @ p["w1"] + p["b1"], 0.0)
    h = jnp.maximum(h @ p["w2"] + p["b2"], 0.0)
    h = jnp.maximum(h @ p["w3"] + p["b3"], 0.0)
    return h @ p["w4"] + p["b4"]


def dqn_reference_bf16(x, kp):
    """Reference with the kernel's numerics (bf16 MXU inputs, f32 accumulate,
    f32 bias/ReLU); output kept in f32 (kernel additionally rounds to bf16)."""
    h = x
    for i in range(1, 5):
        h = jnp.dot(h.astype(jnp.bfloat16), kp[f"w{i}"],
                    preferred_element_type=jnp.float32) + kp[f"b{i}"]
        if i < 4:
            h = jnp.maximum(h, 0.0)
    return h[:, :kp["n_out"]]


if __name__ == "__main__":
    key = jax.random.PRNGKey(0)
    inputs, outputs = 16, 4

    kx, kp_key = jax.random.split(key)
    kernel_params, ref_params = init_params(kp_key, inputs, outputs)

    # --- small batch (single tile path) ---
    batch = 2
    x = jax.random.normal(kx, (batch, inputs), jnp.float32)
    y = jax.block_until_ready(dqn_forward(x, kernel_params))
    assert y.shape == (batch, outputs)
    y_bf16 = dqn_reference_bf16(x, kernel_params)
    assert jnp.allclose(y, y_bf16, atol=2e-2, rtol=2e-2)
    y_f32 = dqn_reference_f32(x, ref_params)
    assert jnp.allclose(y, y_f32, atol=5e-2, rtol=5e-2)

    # --- larger, non-multiple batch (multi-tile path, tight padding) ---
    batch2 = 300
    x2 = jax.random.normal(jax.random.PRNGKey(1), (batch2, inputs), jnp.float32)
    y2 = jax.block_until_ready(dqn_forward(x2, kernel_params))
    assert y2.shape == (batch2, outputs)
    y2_bf16 = dqn_reference_bf16(x2, kernel_params)
    assert jnp.allclose(y2, y2_bf16, atol=2e-2, rtol=2e-2)

    print("KERNEL_OK")
</pallas_src>

<mosaic_0001>
module attributes {stable_mosaic.version = 11 : i64} {
  func.func @dqn_kernel(%arg0: i32, %arg1: memref<8x16xf32, #tpu.memory_space<vmem>>, %arg2: memref<16x256xbf16, #tpu.memory_space<vmem>>, %arg3: memref<1x256xf32, #tpu.memory_space<vmem>>, %arg4: memref<256x384xbf16, #tpu.memory_space<vmem>>, %arg5: memref<1x384xf32, #tpu.memory_space<vmem>>, %arg6: memref<384x256xbf16, #tpu.memory_space<vmem>>, %arg7: memref<1x256xf32, #tpu.memory_space<vmem>>, %arg8: memref<256x128xbf16, #tpu.memory_space<vmem>>, %arg9: memref<1x128xf32, #tpu.memory_space<vmem>>, %arg10: memref<8x128xbf16, #tpu.memory_space<vmem>>) attributes {dimension_semantics = [#tpu.dimension_semantics<parallel>], iteration_bounds = array<i64: 1>, scalar_prefetch = 0 : i64, scratch_operands = 0 : i64, tpu.core_type = #tpu.core_type<tc>, window_params = [{transform_indices = @transform_0, window_bounds = array<i64: 8, 16>}, {pipeline_mode = #tpu.pipeline_mode<synchronous>, transform_indices = @transform_1, window_bounds = array<i64: 16, 256>}, {pipeline_mode = #tpu.pipeline_mode<synchronous>, transform_indices = @transform_2, window_bounds = array<i64: 1, 256>}, {pipeline_mode = #tpu.pipeline_mode<synchronous>, transform_indices = @transform_3, window_bounds = array<i64: 256, 384>}, {pipeline_mode = #tpu.pipeline_mode<synchronous>, transform_indices = @transform_4, window_bounds = array<i64: 1, 384>}, {pipeline_mode = #tpu.pipeline_mode<synchronous>, transform_indices = @transform_5, window_bounds = array<i64: 384, 256>}, {pipeline_mode = #tpu.pipeline_mode<synchronous>, transform_indices = @transform_6, window_bounds = array<i64: 1, 256>}, {pipeline_mode = #tpu.pipeline_mode<synchronous>, transform_indices = @transform_7, window_bounds = array<i64: 256, 128>}, {pipeline_mode = #tpu.pipeline_mode<synchronous>, transform_indices = @transform_8, window_bounds = array<i64: 1, 128>}, {transform_indices = @transform_9, window_bounds = array<i64: 8, 128>}]} {
    %c0 = arith.constant 0 : index
    %c0_0 = arith.constant 0 : index
    %0 = vector.load %arg1[%c0, %c0_0] : memref<8x16xf32, #tpu.memory_space<vmem>>, vector<8x16xf32>
    %1 = arith.truncf %0 : vector<8x16xf32> to vector<8x16xbf16>
    %c0_1 = arith.constant 0 : index
    %c0_2 = arith.constant 0 : index
    %2 = vector.load %arg2[%c0_1, %c0_2] : memref<16x256xbf16, #tpu.memory_space<vmem>>, vector<16x256xbf16>
    %cst = arith.constant dense<0.000000e+00> : vector<8x256xf32>
    %3 = tpu.matmul %1, %2, %cst {dimension_numbers = #tpu.dot_dimension_numbers<[1], [0], [0], [1], [0, 0, 1, 1], [], []>} : vector<8x16xbf16>, vector<16x256xbf16>, vector<8x256xf32> -> vector<8x256xf32>
    %c0_3 = arith.constant 0 : index
    %c0_4 = arith.constant 0 : index
    %4 = vector.load %arg3[%c0_3, %c0_4] : memref<1x256xf32, #tpu.memory_space<vmem>>, vector<1x256xf32>
    %5 = vector.broadcast %4 : vector<1x256xf32> to vector<8x256xf32>
    %6 = arith.addf %3, %5 : vector<8x256xf32>
    %cst_5 = arith.constant 0.000000e+00 : f32
    %7 = vector.broadcast %cst_5 : f32 to vector<8x256xf32>
    %8 = arith.maximumf %6, %7 : vector<8x256xf32>
    %9 = arith.truncf %8 : vector<8x256xf32> to vector<8x256xbf16>
    %c0_6 = arith.constant 0 : index
    %c0_7 = arith.constant 0 : index
    %10 = vector.load %arg4[%c0_6, %c0_7] : memref<256x384xbf16, #tpu.memory_space<vmem>>, vector<256x384xbf16>
    %cst_8 = arith.constant dense<0.000000e+00> : vector<8x384xf32>
    %11 = tpu.matmul %9, %10, %cst_8 {dimension_numbers = #tpu.dot_dimension_numbers<[1], [0], [0], [1], [0, 0, 1, 1], [], []>} : vector<8x256xbf16>, vector<256x384xbf16>, vector<8x384xf32> -> vector<8x384xf32>
    %c0_9 = arith.constant 0 : index
    %c0_10 = arith.constant 0 : index
    %12 = vector.load %arg5[%c0_9, %c0_10] : memref<1x384xf32, #tpu.memory_space<vmem>>, vector<1x384xf32>
    %13 = vector.broadcast %12 : vector<1x384xf32> to vector<8x384xf32>
    %14 = arith.addf %11, %13 : vector<8x384xf32>
    %cst_11 = arith.constant 0.000000e+00 : f32
    %15 = vector.broadcast %cst_11 : f32 to vector<8x384xf32>
    %16 = arith.maximumf %14, %15 : vector<8x384xf32>
    %17 = arith.truncf %16 : vector<8x384xf32> to vector<8x384xbf16>
    %c0_12 = arith.constant 0 : index
    %c0_13 = arith.constant 0 : index
    %18 = vector.load %arg6[%c0_12, %c0_13] : memref<384x256xbf16, #tpu.memory_space<vmem>>, vector<384x256xbf16>
    %cst_14 = arith.constant dense<0.000000e+00> : vector<8x256xf32>
    %19 = tpu.matmul %17, %18, %cst_14 {dimension_numbers = #tpu.dot_dimension_numbers<[1], [0], [0], [1], [0, 0, 1, 1], [], []>} : vector<8x384xbf16>, vector<384x256xbf16>, vector<8x256xf32> -> vector<8x256xf32>
    %c0_15 = arith.constant 0 : index
    %c0_16 = arith.constant 0 : index
    %20 = vector.load %arg7[%c0_15, %c0_16] : memref<1x256xf32, #tpu.memory_space<vmem>>, vector<1x256xf32>
    %21 = vector.broadcast %20 : vector<1x256xf32> to vector<8x256xf32>
    %22 = arith.addf %19, %21 : vector<8x256xf32>
    %cst_17 = arith.constant 0.000000e+00 : f32
    %23 = vector.broadcast %cst_17 : f32 to vector<8x256xf32>
    %24 = arith.maximumf %22, %23 : vector<8x256xf32>
    %25 = arith.truncf %24 : vector<8x256xf32> to vector<8x256xbf16>
    %c0_18 = arith.constant 0 : index
    %c0_19 = arith.constant 0 : index
    %26 = vector.load %arg8[%c0_18, %c0_19] : memref<256x128xbf16, #tpu.memory_space<vmem>>, vector<256x128xbf16>
    %cst_20 = arith.constant dense<0.000000e+00> : vector<8x128xf32>
    %27 = tpu.matmul %25, %26, %cst_20 {dimension_numbers = #tpu.dot_dimension_numbers<[1], [0], [0], [1], [0, 0, 1, 1], [], []>} : vector<8x256xbf16>, vector<256x128xbf16>, vector<8x128xf32> -> vector<8x128xf32>
    %c0_21 = arith.constant 0 : index
    %c0_22 = arith.constant 0 : index
    %28 = vector.load %arg9[%c0_21, %c0_22] : memref<1x128xf32, #tpu.memory_space<vmem>>, vector<1x128xf32>
    %29 = vector.broadcast %28 : vector<1x128xf32> to vector<8x128xf32>
    %30 = arith.addf %27, %29 : vector<8x128xf32>
    %31 = arith.truncf %30 : vector<8x128xf32> to vector<8x128xbf16>
    %c0_23 = arith.constant 0 : index
    %c0_24 = arith.constant 0 : index
    %32 = vector.load %arg10[%c0_23, %c0_24] : memref<8x128xbf16, #tpu.memory_space<vmem>>, vector<8x128xbf16>
    tpu.vector_store %arg10[%c0_23, %c0_24], %31 {strides = array<i32>} : memref<8x128xbf16, #tpu.memory_space<vmem>>, vector<8x128xbf16>,
    return
  }
  func.func @transform_0(%arg0: i32) -> (i32, i32) {
    %c0_i32 = arith.constant 0 : i32
    %c0_i32_0 = arith.constant 0 : i32
    return %arg0, %c0_i32 : i32, i32
  }
  func.func @transform_1(%arg0: i32) -> (i32, i32) {
    %c0_i32 = arith.constant 0 : i32
    %c0_i32_0 = arith.constant 0 : i32
    %c0_i32_1 = arith.constant 0 : i32
    return %c0_i32, %c0_i32_0 : i32, i32
  }
  func.func @transform_2(%arg0: i32) -> (i32, i32) {
    %c0_i32 = arith.constant 0 : i32
    %c0_i32_0 = arith.constant 0 : i32
    %c0_i32_1 = arith.constant 0 : i32
    return %c0_i32, %c0_i32_0 : i32, i32
  }
  func.func @transform_3(%arg0: i32) -> (i32, i32) {
    %c0_i32 = arith.constant 0 : i32
    %c0_i32_0 = arith.constant 0 : i32
    %c0_i32_1 = arith.constant 0 : i32
    return %c0_i32, %c0_i32_0 : i32, i32
  }
  func.func @transform_4(%arg0: i32) -> (i32, i32) {
    %c0_i32 = arith.constant 0 : i32
    %c0_i32_0 = arith.constant 0 : i32
    %c0_i32_1 = arith.constant 0 : i32
    return %c0_i32, %c0_i32_0 : i32, i32
  }
  func.func @transform_5(%arg0: i32) -> (i32, i32) {
    %c0_i32 = arith.constant 0 : i32
    %c0_i32_0 = arith.constant 0 : i32
    %c0_i32_1 = arith.constant 0 : i32
    return %c0_i32, %c0_i32_0 : i32, i32
  }
  func.func @transform_6(%arg0: i32) -> (i32, i32) {
    %c0_i32 = arith.constant 0 : i32
    %c0_i32_0 = arith.constant 0 : i32
    %c0_i32_1 = arith.constant 0 : i32
    return %c0_i32, %c0_i32_0 : i32, i32
  }
  func.func @transform_7(%arg0: i32) -> (i32, i32) {
    %c0_i32 = arith.constant 0 : i32
    %c0_i32_0 = arith.constant 0 : i32
    %c0_i32_1 = arith.constant 0 : i32
    return %c0_i32, %c0_i32_0 : i32, i32
  }
  func.func @transform_8(%arg0: i32) -> (i32, i32) {
    %c0_i32 = arith.constant 0 : i32
    %c0_i32_0 = arith.constant 0 : i32
    %c0_i32_1 = arith.constant 0 : i32
    return %c0_i32, %c0_i32_0 : i32, i32
  }
  func.func @transform_9(%arg0: i32) -> (i32, i32) {
    %c0_i32 = arith.constant 0 : i32
    %c0_i32_0 = arith.constant 0 : i32
    return %arg0, %c0_i32 : i32, i32
  }
}

</mosaic_0001>

<llo_original>
// kernel: tpu_custom_call.1
$region0: #{tpu_custom_call.1}
  #allocation0 [shape = 'u32[]', space=smem, size = 0x4, offset = 0x4, fixed_abs, tag = 'smem constant byte address 0x4 - core index']
  #allocation1 [shape = 'u32[72,128]{1,0:T(1,128)}', space=vmem, size = 0x9000, scoped, tag = 'internal scratch']
  %s0 = inlined_call_operand.hbm [shape: f32[8,16], index: 0, kind: input, shape index: {}]
  %s1 = inlined_call_operand.hbm [shape: bf16[16,256], index: 1, kind: input, shape index: {}]
  %s2 = inlined_call_operand.hbm [shape: f32[1,256], index: 2, kind: input, shape index: {}]
  %s3 = inlined_call_operand.hbm [shape: bf16[256,384], index: 3, kind: input, shape index: {}]
  %s4 = inlined_call_operand.vmem [shape: f32[1,384], index: 4, kind: input, shape index: {}]
  %s5 = inlined_call_operand.hbm [shape: bf16[384,256], index: 5, kind: input, shape index: {}]
  %s6 = inlined_call_operand.vmem [shape: f32[1,256], index: 6, kind: input, shape index: {}]
  %s7 = inlined_call_operand.hbm [shape: bf16[256,128], index: 7, kind: input, shape index: {}]
  %s8 = inlined_call_operand.vmem [shape: f32[1,128], index: 8, kind: input, shape index: {}]
  %s9 = inlined_call_operand.hbm [shape: bf16[8,128], index: 9, kind: output, shape index: {}]
  %s10 = sld [smem:[#allocation0]]
  $region70: #{tpu_custom_call.1} parent=0
    _
  %s12 = ssub.s32 1, %s10
  %s13 = scalar_select 0, %s12, %s10
  $region1: #{tpu_custom_call.1} parent=0
    #allocation2 [shape = 'u8[4096]{0}', space=vmem, size = 0x1000, scoped, tag = 'input window, operand 0, single buffered']
    #allocation3 [shape = 's32[1]{0}', space=sflag, size = 0x4, scoped, tag = 'scoped memory for tpu_custom_call.1']
    #allocation4 [shape = 's32[1]{0}', space=sflag, size = 0x4, scoped, tag = 'scoped memory for tpu_custom_call.1']
    #allocation5 [shape = 'u8[8192]{0}', space=vmem, size = 0x2000, scoped, tag = 'input window, operand 1, single buffered']
    #allocation6 [shape = 's32[1]{0}', space=sflag, size = 0x4, scoped, tag = 'scoped memory for tpu_custom_call.1']
    #allocation7 [shape = 'u8[1024]{0}', space=vmem, size = 0x400, scoped, tag = 'input window, operand 2, single buffered']
    #allocation8 [shape = 'u8[196608]{0}', space=vmem, size = 0x30000, scoped, tag = 'input window, operand 3, single buffered']
    #allocation9 [shape = 's32[1]{0}', space=sflag, size = 0x4, scoped, tag = 'scoped memory for tpu_custom_call.1']
    #allocation10 [shape = 'u8[196608]{0}', space=vmem, size = 0x30000, scoped, tag = 'input window, operand 5, single buffered']
    #allocation11 [shape = 'u8[65536]{0}', space=vmem, size = 0x10000, scoped, tag = 'input window, operand 7, single buffered']
    #allocation12 [shape = 's32[1]{0}', space=sflag, size = 0x4, scoped, tag = 'scoped memory for tpu_custom_call.1']
    #allocation13 [shape = 'u8[2048]{0}', space=vmem, size = 0x800, scoped, tag = 'output window, operand 0, single buffered']
    %14 = vsyncpa [#allocation3], 0
    %15 = vsyncpa [#allocation6], 0
    %16 = vsyncpa [#allocation9], 0
    %17 = vsyncpa [#allocation12], 0
    %18 = vsyncpa [#allocation4], 0
    // Predicated region
    $region2: #{tpu_custom_call.1} parent=1 // pred_check
      _
    $region3: #{tpu_custom_call.1} parent=1 // pred_check_branch
      %20 = sbr.rel (0) target = $region5
    $region4: #{tpu_custom_call.1} parent=1 // pred_region
      %22 = vsyncadd [#allocation3], 0
      %s24 = sshll.u32 %s0, 4
      %s25 = int_to_ptr.hbm [resolvable:$true] %s24
      %s26 = sshll.u32 [#allocation2], 4
      %s27 = int_to_ptr.vmem [resolvable:$true] %s26
      %29 = dma.hbm_to_vmem [thread:$0]  %s25, 128, %s27, [#allocation3]
    $region5: #{tpu_custom_call.1} parent=1 // pred_fallthru
      _
    // Predicated region
    $region6: #{tpu_custom_call.1} parent=1 // pred_check
      _
    $region7: #{tpu_custom_call.1} parent=1 // pred_check_branch
      %31 = sbr.rel (0) target = $region9
    $region8: #{tpu_custom_call.1} parent=1 // pred_region
      %33 = vsyncadd [#allocation6], 0
      %s34 = sshll.u32 %s1, 4
      %s35 = int_to_ptr.hbm [resolvable:$true] %s34
      %s36 = sshll.u32 [#allocation5], 4
      %s37 = int_to_ptr.vmem [resolvable:$true] %s36
      %42 = dma.hbm_to_vmem [thread:$0]  %s35, 256, %s37, [#allocation6], 128, 128, 8
    $region9: #{tpu_custom_call.1} parent=1 // pred_fallthru
      _
    // Predicated region
    $region10: #{tpu_custom_call.1} parent=1 // pred_check
      _
    $region11: #{tpu_custom_call.1} parent=1 // pred_check_branch
      %44 = sbr.rel (0) target = $region13
    $region12: #{tpu_custom_call.1} parent=1 // pred_region
      %46 = vsyncadd [#allocation6], 0
      %s48 = sshll.u32 %s2, 4
      %s49 = int_to_ptr.hbm [resolvable:$true] %s48
      %s50 = sshll.u32 [#allocation7], 4
      %s51 = int_to_ptr.vmem [resolvable:$true] %s50
      %53 = dma.hbm_to_vmem [thread:$0]  %s49, 32, %s51, [#allocation6]
    $region13: #{tpu_custom_call.1} parent=1 // pred_fallthru
      _
    // Predicated region
    $region14: #{tpu_custom_call.1} parent=1 // pred_check
      _
    $region15: #{tpu_custom_call.1} parent=1 // pred_check_branch
      %55 = sbr.rel (0) target = $region17
    $region16: #{tpu_custom_call.1} parent=1 // pred_region
      %57 = vsyncadd [#allocation9], 0
      %s58 = sshll.u32 %s3, 4
      %s59 = int_to_ptr.hbm [resolvable:$true] %s58
      %s60 = sshll.u32 [#allocation8], 4
      %s61 = int_to_ptr.vmem [resolvable:$true] %s60
      %66 = dma.hbm_to_vmem [thread:$0]  %s59, 6144, %s61, [#allocation9], 192, 192, 12
    $region17: #{tpu_custom_call.1} parent=1 // pred_fallthru
      _
    // Predicated region
    $region18: #{tpu_custom_call.1} parent=1 // pred_check
      _
    $region19: #{tpu_custom_call.1} parent=1 // pred_check_branch
      %68 = sbr.rel (0) target = $region21
    $region20: #{tpu_custom_call.1} parent=1 // pred_region
      _
    $region21: #{tpu_custom_call.1} parent=1 // pred_fallthru
      _
    // Predicated region
    $region22: #{tpu_custom_call.1} parent=1 // pred_check
      _
    $region23: #{tpu_custom_call.1} parent=1 // pred_check_branch
      %70 = sbr.rel (0) target = $region25
    $region24: #{tpu_custom_call.1} parent=1 // pred_region
      %72 = vsyncadd [#allocation9], 0
      %s73 = sshll.u32 %s5, 4
      %s74 = int_to_ptr.hbm [resolvable:$true] %s73
      %s75 = sshll.u32 [#allocation10], 4
      %s76 = int_to_ptr.vmem [resolvable:$true] %s75
      %81 = dma.hbm_to_vmem [thread:$0]  %s74, 6144, %s76, [#allocation9], 128, 128, 8
    $region25: #{tpu_custom_call.1} parent=1 // pred_fallthru
      _
    // Predicated region
    $region26: #{tpu_custom_call.1} parent=1 // pred_check
      _
    $region27: #{tpu_custom_call.1} parent=1 // pred_check_branch
      %83 = sbr.rel (0) target = $region29
    $region28: #{tpu_custom_call.1} parent=1 // pred_region
      _
    $region29: #{tpu_custom_call.1} parent=1 // pred_fallthru
      _
    // Predicated region
    $region30: #{tpu_custom_call.1} parent=1 // pred_check
      _
    $region31: #{tpu_custom_call.1} parent=1 // pred_check_branch
      %85 = sbr.rel (0) target = $region33
    $region32: #{tpu_custom_call.1} parent=1 // pred_region
      %87 = vsyncadd [#allocation12], 0
      %s88 = sshll.u32 %s7, 4
      %s89 = int_to_ptr.hbm [resolvable:$true] %s88
      %s90 = sshll.u32 [#allocation11], 4
      %s91 = int_to_ptr.vmem [resolvable:$true] %s90
      %96 = dma.hbm_to_vmem [thread:$0]  %s89, 2048, %s91, [#allocation12], 64, 64, 4
    $region33: #{tpu_custom_call.1} parent=1 // pred_fallthru
      _
    // Predicated region
    $region34: #{tpu_custom_call.1} parent=1 // pred_check
      _
    $region35: #{tpu_custom_call.1} parent=1 // pred_check_branch
      %98 = sbr.rel (0) target = $region37
    $region36: #{tpu_custom_call.1} parent=1 // pred_region
      _
    $region37: #{tpu_custom_call.1} parent=1 // pred_fallthru
      _
    // Predicated region
    $region38: #{tpu_custom_call.1} parent=1 // pred_check
      _
    $region39: #{tpu_custom_call.1} parent=1 // pred_check_branch
      %100 = sbr.rel (0) target = $region41
    $region40: #{tpu_custom_call.1} parent=1 // pred_region
      %102 = dma.done [#allocation3], 128
    $region41: #{tpu_custom_call.1} parent=1 // pred_fallthru
      _
    // Predicated region
    $region42: #{tpu_custom_call.1} parent=1 // pred_check
      _
    $region43: #{tpu_custom_call.1} parent=1 // pred_check_branch
      %104 = sbr.rel (0) target = $region45
    $region44: #{tpu_custom_call.1} parent=1 // pred_region
      %106 = dma.done [#allocation6], 256
    $region45: #{tpu_custom_call.1} parent=1 // pred_fallthru
      _
    // Predicated region
    $region46: #{tpu_custom_call.1} parent=1 // pred_check
      _
    $region47: #{tpu_custom_call.1} parent=1 // pred_check_branch
      %108 = sbr.rel (0) target = $region49
    $region48: #{tpu_custom_call.1} parent=1 // pred_region
      %110 = dma.done [#allocation6], 32
    $region49: #{tpu_custom_call.1} parent=1 // pred_fallthru
      _
    // Predicated region
    $region50: #{tpu_custom_call.1} parent=1 // pred_check
      _
    $region51: #{tpu_custom_call.1} parent=1 // pred_check_branch
      %112 = sbr.rel (0) target = $region53
    $region52: #{tpu_custom_call.1} parent=1 // pred_region
      %114 = dma.done [#allocation9], 6144
    $region53: #{tpu_custom_call.1} parent=1 // pred_fallthru
      _
    // Predicated region
    $region54: #{tpu_custom_call.1} parent=1 // pred_check
      _
    $region55: #{tpu_custom_call.1} parent=1 // pred_check_branch
      %116 = sbr.rel (0) target = $region57
    $region56: #{tpu_custom_call.1} parent=1 // pred_region
      %118 = dma.done [#allocation9], 6144
    $region57: #{tpu_custom_call.1} parent=1 // pred_fallthru
      _
    // Predicated region
    $region58: #{tpu_custom_call.1} parent=1 // pred_check
      _
    $region59: #{tpu_custom_call.1} parent=1 // pred_check_branch
      %120 = sbr.rel (0) target = $region61
    $region60: #{tpu_custom_call.1} parent=1 // pred_region
      %122 = dma.done [#allocation12], 2048
    $region61: #{tpu_custom_call.1} parent=1 // pred_fallthru
      _
    %v124 = vld [vmem:[#allocation2] sm:$0xff]
    %v125 = vpack.c.bf16 %v124, %v124
    %v126 = vld [vmem:[#allocation5] sm:$0xff]
    %v127 = vld [vmem:[#allocation5 + $0x8] sm:$0xff]
    %v128 = vld [vmem:[#allocation7] sm:$0x3]
    %v130 = vperm.slane %v128, 0
    %v131 = vperm.slane %v128, 1
    %v136 = vunpack.c.l.b16 %v126
    %v137 = vunpack.c.h.b16 %v126
    %v138 = vunpack.c.l.b16 %v127
    %v139 = vunpack.c.h.b16 %v127
    %v140 = vpack.c.b16 %v138, %v136
    %v141 = vpack.c.b16 %v139, %v137
    %vm144 = vcmask 130048
    %v146 = vsel %vm144, %v125, 0
    %148 = vmatpush.bf16.msra.mxu0 0
    %149 = vmatpush.bf16.msra.mxu0 0
    %150 = vmatpush.bf16.msra.mxu0 0
    %151 = vmatpush.bf16.msra.mxu0 0
    %152 = vmatpush.bf16.msra.mxu0 0
    %153 = vmatpush.bf16.msra.mxu0 0
    %154 = vmatpush.bf16.msra.mxu0 0
    %155 = vmatpush.bf16.msra.mxu0 %v140
    %156 = vmatmul.bf16.gmra.mxu0 %v146
    %v157 = vpop.f32.mrf.mxu0
    %v158 = vadd.f32 %v130, %v157
    %v159 = vpop.f32.mrf.mxu0
    %160 = vdwg.mxu0
    %161 = vmatpush.bf16.msra.mxu0 0
    %162 = vmatpush.bf16.msra.mxu0 0
    %163 = vmatpush.bf16.msra.mxu0 0
    %164 = vmatpush.bf16.msra.mxu0 0
    %165 = vmatpush.bf16.msra.mxu0 0
    %166 = vmatpush.bf16.msra.mxu0 0
    %167 = vmatpush.bf16.msra.mxu0 0
    %168 = vmatpush.bf16.msra.mxu0 %v141
    %169 = vmatmul.bf16.gmra.mxu0 %v146
    %v170 = vpop.f32.mrf.mxu0
    %v171 = vadd.f32 %v131, %v170
    %v172 = vpop.f32.mrf.mxu0
    %173 = vdwg.mxu0
    %v174 = vmax.f32 %v158, 0.0
    %v175 = vmax.f32 %v171, 0.0
    %v176 = vpack.c.bf16 %v174, %v174
    %v177 = vpack.c.bf16 %v175, %v175
    %v178 = vld [vmem:[#allocation8] sm:$0xff]
    %v179 = vld [vmem:[#allocation8 + $0x8] sm:$0xf]
    %v180 = vld [vmem:[#allocation8 + $0xc] sm:$0xff]
    %v181 = vld [vmem:[#allocation8 + $0x14] sm:$0xf]
    %v182 = vld [vmem:[#allocation8 + $0x18] sm:$0xff]
    %v183 = vld [vmem:[#allocation8 + $0x20] sm:$0xf]
    %v184 = vld [vmem:[#allocation8 + $0x24] sm:$0xff]
    %v185 = vld [vmem:[#allocation8 + $0x2c] sm:$0xf]
    %v186 = vld [vmem:[#allocation8 + $0x30] sm:$0xff]
    %v187 = vld [vmem:[#allocation8 + $0x38] sm:$0xf]
    %v188 = vld [vmem:[#allocation8 + $0x3c] sm:$0xff]
    %v189 = vld [vmem:[#allocation8 + $0x44] sm:$0xf]
    %v190 = vld [vmem:[#allocation8 + $0x48] sm:$0xff]
    %v191 = vld [vmem:[#allocation8 + $0x50] sm:$0xf]
    %v192 = vld [vmem:[#allocation8 + $0x54] sm:$0xff]
    %v193 = vld [vmem:[#allocation8 + $0x5c] sm:$0xf]
    %v194 = vld [vmem:[#allocation8 + $0x60] sm:$0xff]
    %v195 = vld [vmem:[#allocation8 + $0x68] sm:$0xf]
    %v196 = vld [vmem:[#allocation8 + $0x6c] sm:$0xff]
    %v197 = vld [vmem:[#allocation8 + $0x74] sm:$0xf]
    %v198 = vld [vmem:[#allocation8 + $0x78] sm:$0xff]
    %v199 = vld [vmem:[#allocation8 + $0x80] sm:$0xf]
    %v200 = vld [vmem:[#allocation8 + $0x84] sm:$0xff]
    %v201 = vld [vmem:[#allocation8 + $0x8c] sm:$0xf]
    %v202 = vld [vmem:[#allocation8 + $0x90] sm:$0xff]
    %v203 = vld [vmem:[#allocation8 + $0x98] sm:$0xf]
    %v204 = vld [vmem:[#allocation8 + $0x9c] sm:$0xff]
    %v205 = vld [vmem:[#allocation8 + $0xa4] sm:$0xf]
    %v206 = vld [vmem:[#allocation8 + $0xa8] sm:$0xff]
    %v207 = vld [vmem:[#allocation8 + $0xb0] sm:$0xf]
    %v208 = vld [vmem:[#allocation8 + $0xb4] sm:$0xff]
    %v209 = vld [vmem:[#allocation8 + $0xbc] sm:$0xf]
    %v210 = vld [vmem:[#allocation8 + $0xc0] sm:$0xff]
    %v211 = vld [vmem:[#allocation8 + $0xc8] sm:$0xf]
    %v212 = vld [vmem:[#allocation8 + $0xcc] sm:$0xff]
    %v213 = vld [vmem:[#allocation8 + $0xd4] sm:$0xf]
    %v214 = vld [vmem:[#allocation8 + $0xd8] sm:$0xff]
    %v215 = vld [vmem:[#allocation8 + $0xe0] sm:$0xf]
    %v216 = vld [vmem:[#allocation8 + $0xe4] sm:$0xff]
    %v217 = vld [vmem:[#allocation8 + $0xec] sm:$0xf]
    %v218 = vld [vmem:[#allocation8 + $0xf0] sm:$0xff]
    %v219 = vld [vmem:[#allocation8 + $0xf8] sm:$0xf]
    %v220 = vld [vmem:[#allocation8 + $0xfc] sm:$0xff]
    %v221 = vld [vmem:[#allocation8 + $0x104] sm:$0xf]
    %v222 = vld [vmem:[#allocation8 + $0x108] sm:$0xff]
    %v223 = vld [vmem:[#allocation8 + $0x110] sm:$0xf]
    %v224 = vld [vmem:[#allocation8 + $0x114] sm:$0xff]
    %v225 = vld [vmem:[#allocation8 + $0x11c] sm:$0xf]
    %v226 = vld [vmem:[#allocation8 + $0x120] sm:$0xff]
    %v227 = vld [vmem:[#allocation8 + $0x128] sm:$0xf]
    %v228 = vld [vmem:[#allocation8 + $0x12c] sm:$0xff]
    %v229 = vld [vmem:[#allocation8 + $0x134] sm:$0xf]
    %v230 = vld [vmem:[#allocation8 + $0x138] sm:$0xff]
    %v231 = vld [vmem:[#allocation8 + $0x140] sm:$0xf]
    %v232 = vld [vmem:[#allocation8 + $0x144] sm:$0xff]
    %v233 = vld [vmem:[#allocation8 + $0x14c] sm:$0xf]
    %v234 = vld [vmem:[#allocation8 + $0x150] sm:$0xff]
    %v235 = vld [vmem:[#allocation8 + $0x158] sm:$0xf]
    %v236 = vld [vmem:[#allocation8 + $0x15c] sm:$0xff]
    %v237 = vld [vmem:[#allocation8 + $0x164] sm:$0xf]
    %v238 = vld [vmem:[#allocation8 + $0x168] sm:$0xff]
    %v239 = vld [vmem:[#allocation8 + $0x170] sm:$0xf]
    %v240 = vld [vmem:[#allocation8 + $0x174] sm:$0xff]
    %v241 = vld [vmem:[#allocation8 + $0x17c] sm:$0xf]
    %v242 = vld [vmem:[%s4] sm:$0x7]
    %v244 = vperm.slane %v242, 0
    %v245 = vperm.slane %v242, 1
    %v246 = vperm.slane %v242, 2
    %v314 = vunpack.c.l.b16 %v178
    %v315 = vunpack.c.h.b16 %v178
    %v316 = vunpack.c.l.b16 %v179
    %v317 = vunpack.c.l.b16 %v180
    %v318 = vunpack.c.h.b16 %v180
    %v319 = vunpack.c.l.b16 %v181
    %v320 = vunpack.c.l.b16 %v182
    %v321 = vunpack.c.h.b16 %v182
    %v322 = vunpack.c.l.b16 %v183
    %v323 = vunpack.c.l.b16 %v184
    %v324 = vunpack.c.h.b16 %v184
    %v325 = vunpack.c.l.b16 %v185
    %v326 = vunpack.c.l.b16 %v186
    %v327 = vunpack.c.h.b16 %v186
    %v328 = vunpack.c.l.b16 %v187
    %v329 = vunpack.c.l.b16 %v188
    %v330 = vunpack.c.h.b16 %v188
    %v331 = vunpack.c.l.b16 %v189
    %v332 = vunpack.c.l.b16 %v190
    %v333 = vunpack.c.h.b16 %v190
    %v334 = vunpack.c.l.b16 %v191
    %v335 = vunpack.c.l.b16 %v192
    %v336 = vunpack.c.h.b16 %v192
    %v337 = vunpack.c.l.b16 %v193
    %v338 = vunpack.c.l.b16 %v194
    %v339 = vunpack.c.h.b16 %v194
    %v340 = vunpack.c.l.b16 %v195
    %v341 = vunpack.c.l.b16 %v196
    %v342 = vunpack.c.h.b16 %v196
    %v343 = vunpack.c.l.b16 %v197
    %v344 = vunpack.c.l.b16 %v198
    %v345 = vunpack.c.h.b16 %v198
    %v346 = vunpack.c.l.b16 %v199
    %v347 = vunpack.c.l.b16 %v200
    %v348 = vunpack.c.h.b16 %v200
    %v349 = vunpack.c.l.b16 %v201
    %v350 = vunpack.c.l.b16 %v202
    %v351 = vunpack.c.h.b16 %v202
    %v352 = vunpack.c.l.b16 %v203
    %v353 = vunpack.c.l.b16 %v204
    %v354 = vunpack.c.h.b16 %v204
    %v355 = vunpack.c.l.b16 %v205
    %v356 = vunpack.c.l.b16 %v206
    %v357 = vunpack.c.h.b16 %v206
    %v358 = vunpack.c.l.b16 %v207
    %v359 = vunpack.c.l.b16 %v208
    %v360 = vunpack.c.h.b16 %v208
    %v361 = vunpack.c.l.b16 %v209
    %v362 = vunpack.c.l.b16 %v210
    %v363 = vunpack.c.h.b16 %v210
    %v364 = vunpack.c.l.b16 %v211
    %v365 = vunpack.c.l.b16 %v212
    %v366 = vunpack.c.h.b16 %v212
    %v367 = vunpack.c.l.b16 %v213
    %v368 = vunpack.c.l.b16 %v214
    %v369 = vunpack.c.h.b16 %v214
    %v370 = vunpack.c.l.b16 %v215
    %v371 = vunpack.c.l.b16 %v216
    %v372 = vunpack.c.h.b16 %v216
    %v373 = vunpack.c.l.b16 %v217
    %v374 = vunpack.c.l.b16 %v218
    %v375 = vunpack.c.h.b16 %v218
    %v376 = vunpack.c.l.b16 %v219
    %v377 = vunpack.c.l.b16 %v220
    %v378 = vunpack.c.h.b16 %v220
    %v379 = vunpack.c.l.b16 %v221
    %v380 = vunpack.c.l.b16 %v222
    %v381 = vunpack.c.h.b16 %v222
    %v382 = vunpack.c.l.b16 %v223
    %v383 = vunpack.c.l.b16 %v224
    %v384 = vunpack.c.h.b16 %v224
    %v385 = vunpack.c.l.b16 %v225
    %v386 = vunpack.c.l.b16 %v226
    %v387 = vunpack.c.h.b16 %v226
    %v388 = vunpack.c.l.b16 %v227
    %v389 = vunpack.c.l.b16 %v228
    %v390 = vunpack.c.h.b16 %v228
    %v391 = vunpack.c.l.b16 %v229
    %v392 = vunpack.c.l.b16 %v230
    %v393 = vunpack.c.h.b16 %v230
    %v394 = vunpack.c.l.b16 %v231
    %v395 = vunpack.c.l.b16 %v232
    %v396 = vunpack.c.h.b16 %v232
    %v397 = vunpack.c.l.b16 %v233
    %v398 = vunpack.c.l.b16 %v234
    %v399 = vunpack.c.h.b16 %v234
    %v400 = vunpack.c.l.b16 %v235
    %v401 = vunpack.c.l.b16 %v236
    %v402 = vunpack.c.h.b16 %v236
    %v403 = vunpack.c.l.b16 %v237
    %v404 = vunpack.c.l.b16 %v238
    %v405 = vunpack.c.h.b16 %v238
    %v406 = vunpack.c.l.b16 %v239
    %v407 = vunpack.c.l.b16 %v240
    %v408 = vunpack.c.h.b16 %v240
    %v409 = vunpack.c.l.b16 %v241
    %v410 = vpack.c.b16 %v317, %v314
    %v411 = vpack.c.b16 %v318, %v315
    %v412 = vpack.c.b16 %v319, %v316
    %v413 = vpack.c.b16 %v323, %v320
    %v414 = vpack.c.b16 %v324, %v321
    %v415 = vpack.c.b16 %v325, %v322
    %v416 = vpack.c.b16 %v329, %v326
    %v417 = vpack.c.b16 %v330, %v327
    %v418 = vpack.c.b16 %v331, %v328
    %v419 = vpack.c.b16 %v335, %v332
    %v420 = vpack.c.b16 %v336, %v333
    %v421 = vpack.c.b16 %v337, %v334
    %v422 = vpack.c.b16 %v341, %v338
    %v423 = vpack.c.b16 %v342, %v339
    %v424 = vpack.c.b16 %v343, %v340
    %v425 = vpack.c.b16 %v347, %v344
    %v426 = vpack.c.b16 %v348, %v345
    %v427 = vpack.c.b16 %v349, %v346
    %v428 = vpack.c.b16 %v353, %v350
    %v429 = vpack.c.b16 %v354, %v351
    %v430 = vpack.c.b16 %v355, %v352
    %v431 = vpack.c.b16 %v359, %v356
    %v432 = vpack.c.b16 %v360, %v357
    %v433 = vpack.c.b16 %v361, %v358
    %v434 = vpack.c.b16 %v365, %v362
    %v435 = vpack.c.b16 %v366, %v363
    %v436 = vpack.c.b16 %v367, %v364
    %v437 = vpack.c.b16 %v371, %v368
    %v438 = vpack.c.b16 %v372, %v369
    %v439 = vpack.c.b16 %v373, %v370
    %v440 = vpack.c.b16 %v377, %v374
    %v441 = vpack.c.b16 %v378, %v375
    %v442 = vpack.c.b16 %v379, %v376
    %v443 = vpack.c.b16 %v383, %v380
    %v444 = vpack.c.b16 %v384, %v381
    %v445 = vpack.c.b16 %v385, %v382
    %v446 = vpack.c.b16 %v389, %v386
    %v447 = vpack.c.b16 %v390, %v387
    %v448 = vpack.c.b16 %v391, %v388
    %v449 = vpack.c.b16 %v395, %v392
    %v450 = vpack.c.b16 %v396, %v393
    %v451 = vpack.c.b16 %v397, %v394
    %v452 = vpack.c.b16 %v401, %v398
    %v453 = vpack.c.b16 %v402, %v399
    %v454 = vpack.c.b16 %v403, %v400
    %v455 = vpack.c.b16 %v407, %v404
    %v456 = vpack.c.b16 %v408, %v405
    %v457 = vpack.c.b16 %v409, %v406
    %506 = vmatpush.bf16.msra.mxu0 %v431
    %507 = vmatpush.bf16.msra.mxu0 %v428
    %508 = vmatpush.bf16.msra.mxu0 %v425
    %509 = vmatpush.bf16.msra.mxu0 %v422
    %510 = vmatpush.bf16.msra.mxu0 %v419
    %511 = vmatpush.bf16.msra.mxu0 %v416
    %512 = vmatpush.bf16.msra.mxu0 %v413
    %513 = vmatpush.bf16.msra.mxu0 %v410
    %514 = vmatmul.bf16.gmra.mxu0 %v176
    %v515 = vpop.f32.mrf.mxu0
    %v516 = vadd.f32 %v244, %v515
    %v517 = vpop.f32.mrf.mxu0
    %518 = vdwg.mxu0
    %519 = vmatpush.bf16.msra.mxu0 %v455
    %520 = vmatpush.bf16.msra.mxu0 %v452
    %521 = vmatpush.bf16.msra.mxu0 %v449
    %522 = vmatpush.bf16.msra.mxu0 %v446
    %523 = vmatpush.bf16.msra.mxu0 %v443
    %524 = vmatpush.bf16.msra.mxu0 %v440
    %525 = vmatpush.bf16.msra.mxu0 %v437
    %526 = vmatpush.bf16.msra.mxu0 %v434
    %527 = vmatmul.bf16.gmra.mxu0 %v177
    %v528 = vpop.f32.mrf.mxu0
    %v529 = vadd.f32 %v516, %v528
    %v530 = vpop.f32.mrf.mxu0
    %531 = vdwg.mxu0
    %532 = vmatpush.bf16.msra.mxu0 %v432
    %533 = vmatpush.bf16.msra.mxu0 %v429
    %534 = vmatpush.bf16.msra.mxu0 %v426
    %535 = vmatpush.bf16.msra.mxu0 %v423
    %536 = vmatpush.bf16.msra.mxu0 %v420
    %537 = vmatpush.bf16.msra.mxu0 %v417
    %538 = vmatpush.bf16.msra.mxu0 %v414
    %539 = vmatpush.bf16.msra.mxu0 %v411
    %540 = vmatmul.bf16.gmra.mxu0 %v176
    %v541 = vpop.f32.mrf.mxu0
    %v542 = vadd.f32 %v245, %v541
    %v543 = vpop.f32.mrf.mxu0
    %544 = vdwg.mxu0
    %545 = vmatpush.bf16.msra.mxu0 %v456
    %546 = vmatpush.bf16.msra.mxu0 %v453
    %547 = vmatpush.bf16.msra.mxu0 %v450
    %548 = vmatpush.bf16.msra.mxu0 %v447
    %549 = vmatpush.bf16.msra.mxu0 %v444
    %550 = vmatpush.bf16.msra.mxu0 %v441
    %551 = vmatpush.bf16.msra.mxu0 %v438
    %552 = vmatpush.bf16.msra.mxu0 %v435
    %553 = vmatmul.bf16.gmra.mxu0 %v177
    %v554 = vpop.f32.mrf.mxu0
    %v555 = vadd.f32 %v542, %v554
    %v556 = vpop.f32.mrf.mxu0
    %557 = vdwg.mxu0
    %558 = vmatpush.bf16.msra.mxu0 %v433
    %559 = vmatpush.bf16.msra.mxu0 %v430
    %560 = vmatpush.bf16.msra.mxu0 %v427
    %561 = vmatpush.bf16.msra.mxu0 %v424
    %562 = vmatpush.bf16.msra.mxu0 %v421
    %563 = vmatpush.bf16.msra.mxu0 %v418
    %564 = vmatpush.bf16.msra.mxu0 %v415
    %565 = vmatpush.bf16.msra.mxu0 %v412
    %566 = vmatmul.bf16.gmra.mxu0 %v176
    %v567 = vpop.f32.mrf.mxu0
    %v568 = vadd.f32 %v246, %v567
    %v569 = vpop.f32.mrf.mxu0
    %570 = vdwg.mxu0
    %571 = vmatpush.bf16.msra.mxu0 %v457
    %572 = vmatpush.bf16.msra.mxu0 %v454
    %573 = vmatpush.bf16.msra.mxu0 %v451
    %574 = vmatpush.bf16.msra.mxu0 %v448
    %575 = vmatpush.bf16.msra.mxu0 %v445
    %576 = vmatpush.bf16.msra.mxu0 %v442
    %577 = vmatpush.bf16.msra.mxu0 %v439
    %578 = vmatpush.bf16.msra.mxu0 %v436
    %579 = vmatmul.bf16.gmra.mxu0 %v177
    %v580 = vpop.f32.mrf.mxu0
    %v581 = vadd.f32 %v568, %v580
    %v582 = vpop.f32.mrf.mxu0
    %583 = vdwg.mxu0
    %v584 = vmax.f32 %v529, 0.0
    %v585 = vmax.f32 %v555, 0.0
    %v586 = vmax.f32 %v581, 0.0
    %v587 = vpack.c.bf16 %v584, %v584
    %v588 = vpack.c.bf16 %v585, %v585
    %v589 = vpack.c.bf16 %v586, %v586
    %v590 = vld [vmem:[#allocation10] sm:$0xff]
    %v591 = vld [vmem:[#allocation10 + $0x8] sm:$0xff]
    %v592 = vld [vmem:[#allocation10 + $0x10] sm:$0xff]
    %v593 = vld [vmem:[#allocation10 + $0x18] sm:$0xff]
    %v594 = vld [vmem:[#allocation10 + $0x20] sm:$0xff]
    %v595 = vld [vmem:[#allocation10 + $0x28] sm:$0xff]
    %v596 = vld [vmem:[#allocation10 + $0x30] sm:$0xff]
    %v597 = vld [vmem:[#allocation10 + $0x38] sm:$0xff]
    %v598 = vld [vmem:[#allocation10 + $0x40] sm:$0xff]
    %v599 = vld [vmem:[#allocation10 + $0x48] sm:$0xff]
    %v600 = vld [vmem:[#allocation10 + $0x50] sm:$0xff]
    %v601 = vld [vmem:[#allocation10 + $0x58] sm:$0xff]
    %v602 = vld [vmem:[#allocation10 + $0x60] sm:$0xff]
    %v603 = vld [vmem:[#allocation10 + $0x68] sm:$0xff]
    %v604 = vld [vmem:[#allocation10 + $0x70] sm:$0xff]
    %v605 = vld [vmem:[#allocation10 + $0x78] sm:$0xff]
    %v606 = vld [vmem:[#allocation10 + $0x80] sm:$0xff]
    %v607 = vld [vmem:[#allocation10 + $0x88] sm:$0xff]
    %v608 = vld [vmem:[#allocation10 + $0x90] sm:$0xff]
    %v609 = vld [vmem:[#allocation10 + $0x98] sm:$0xff]
    %v610 = vld [vmem:[#allocation10 + $0xa0] sm:$0xff]
    %v611 = vld [vmem:[#allocation10 + $0xa8] sm:$0xff]
    %v612 = vld [vmem:[#allocation10 + $0xb0] sm:$0xff]
    %v613 = vld [vmem:[#allocation10 + $0xb8] sm:$0xff]
    %v614 = vld [vmem:[#allocation10 + $0xc0] sm:$0xff]
    %v615 = vld [vmem:[#allocation10 + $0xc8] sm:$0xff]
    %v616 = vld [vmem:[#allocation10 + $0xd0] sm:$0xff]
    %v617 = vld [vmem:[#allocation10 + $0xd8] sm:$0xff]
    %v618 = vld [vmem:[#allocation10 + $0xe0] sm:$0xff]
    %v619 = vld [vmem:[#allocation10 + $0xe8] sm:$0xff]
    %v620 = vld [vmem:[#allocation10 + $0xf0] sm:$0xff]
    %v621 = vld [vmem:[#allocation10 + $0xf8] sm:$0xff]
    %v622 = vld [vmem:[#allocation10 + $0x100] sm:$0xff]
    %v623 = vld [vmem:[#allocation10 + $0x108] sm:$0xff]
    %v624 = vld [vmem:[#allocation10 + $0x110] sm:$0xff]
    %v625 = vld [vmem:[#allocation10 + $0x118] sm:$0xff]
    %v626 = vld [vmem:[#allocation10 + $0x120] sm:$0xff]
    %v627 = vld [vmem:[#allocation10 + $0x128] sm:$0xff]
    %v628 = vld [vmem:[#allocation10 + $0x130] sm:$0xff]
    %v629 = vld [vmem:[#allocation10 + $0x138] sm:$0xff]
    %v630 = vld [vmem:[#allocation10 + $0x140] sm:$0xff]
    %v631 = vld [vmem:[#allocation10 + $0x148] sm:$0xff]
    %v632 = vld [vmem:[#allocation10 + $0x150] sm:$0xff]
    %v633 = vld [vmem:[#allocation10 + $0x158] sm:$0xff]
    %v634 = vld [vmem:[#allocation10 + $0x160] sm:$0xff]
    %v635 = vld [vmem:[#allocation10 + $0x168] sm:$0xff]
    %v636 = vld [vmem:[#allocation10 + $0x170] sm:$0xff]
    %v637 = vld [vmem:[#allocation10 + $0x178] sm:$0xff]
    %v638 = vld [vmem:[%s6] sm:$0x3]
    %v640 = vperm.slane %v638, 0
    %v641 = vperm.slane %v638, 1
    %v692 = vunpack.c.l.b16 %v590
    %v693 = vunpack.c.h.b16 %v590
    %v694 = vunpack.c.l.b16 %v591
    %v695 = vunpack.c.h.b16 %v591
    %v696 = vunpack.c.l.b16 %v592
    %v697 = vunpack.c.h.b16 %v592
    %v698 = vunpack.c.l.b16 %v593
    %v699 = vunpack.c.h.b16 %v593
    %v700 = vunpack.c.l.b16 %v594
    %v701 = vunpack.c.h.b16 %v594
    %v702 = vunpack.c.l.b16 %v595
    %v703 = vunpack.c.h.b16 %v595
    %v704 = vunpack.c.l.b16 %v596
    %v705 = vunpack.c.h.b16 %v596
    %v706 = vunpack.c.l.b16 %v597
    %v707 = vunpack.c.h.b16 %v597
    %v708 = vunpack.c.l.b16 %v598
    %v709 = vunpack.c.h.b16 %v598
    %v710 = vunpack.c.l.b16 %v599
    %v711 = vunpack.c.h.b16 %v599
    %v712 = vunpack.c.l.b16 %v600
    %v713 = vunpack.c.h.b16 %v600
    %v714 = vunpack.c.l.b16 %v601
    %v715 = vunpack.c.h.b16 %v601
    %v716 = vunpack.c.l.b16 %v602
    %v717 = vunpack.c.h.b16 %v602
    %v718 = vunpack.c.l.b16 %v603
    %v719 = vunpack.c.h.b16 %v603
    %v720 = vunpack.c.l.b16 %v604
    %v721 = vunpack.c.h.b16 %v604
    %v722 = vunpack.c.l.b16 %v605
    %v723 = vunpack.c.h.b16 %v605
    %v724 = vunpack.c.l.b16 %v606
    %v725 = vunpack.c.h.b16 %v606
    %v726 = vunpack.c.l.b16 %v607
    %v727 = vunpack.c.h.b16 %v607
    %v728 = vunpack.c.l.b16 %v608
    %v729 = vunpack.c.h.b16 %v608
    %v730 = vunpack.c.l.b16 %v609
    %v731 = vunpack.c.h.b16 %v609
    %v732 = vunpack.c.l.b16 %v610
    %v733 = vunpack.c.h.b16 %v610
    %v734 = vunpack.c.l.b16 %v611
    %v735 = vunpack.c.h.b16 %v611
    %v736 = vunpack.c.l.b16 %v612
    %v737 = vunpack.c.h.b16 %v612
    %v738 = vunpack.c.l.b16 %v613
    %v739 = vunpack.c.h.b16 %v613
    %v740 = vunpack.c.l.b16 %v614
    %v741 = vunpack.c.h.b16 %v614
    %v742 = vunpack.c.l.b16 %v615
    %v743 = vunpack.c.h.b16 %v615
    %v744 = vunpack.c.l.b16 %v616
    %v745 = vunpack.c.h.b16 %v616
    %v746 = vunpack.c.l.b16 %v617
    %v747 = vunpack.c.h.b16 %v617
    %v748 = vunpack.c.l.b16 %v618
    %v749 = vunpack.c.h.b16 %v618
    %v750 = vunpack.c.l.b16 %v619
    %v751 = vunpack.c.h.b16 %v619
    %v752 = vunpack.c.l.b16 %v620
    %v753 = vunpack.c.h.b16 %v620
    %v754 = vunpack.c.l.b16 %v621
    %v755 = vunpack.c.h.b16 %v621
    %v756 = vunpack.c.l.b16 %v622
    %v757 = vunpack.c.h.b16 %v622
    %v758 = vunpack.c.l.b16 %v623
    %v759 = vunpack.c.h.b16 %v623
    %v760 = vunpack.c.l.b16 %v624
    %v761 = vunpack.c.h.b16 %v624
    %v762 = vunpack.c.l.b16 %v625
    %v763 = vunpack.c.h.b16 %v625
    %v764 = vunpack.c.l.b16 %v626
    %v765 = vunpack.c.h.b16 %v626
    %v766 = vunpack.c.l.b16 %v627
    %v767 = vunpack.c.h.b16 %v627
    %v768 = vunpack.c.l.b16 %v628
    %v769 = vunpack.c.h.b16 %v628
    %v770 = vunpack.c.l.b16 %v629
    %v771 = vunpack.c.h.b16 %v629
    %v772 = vunpack.c.l.b16 %v630
    %v773 = vunpack.c.h.b16 %v630
    %v774 = vunpack.c.l.b16 %v631
    %v775 = vunpack.c.h.b16 %v631
    %v776 = vunpack.c.l.b16 %v632
    %v777 = vunpack.c.h.b16 %v632
    %v778 = vunpack.c.l.b16 %v633
    %v779 = vunpack.c.h.b16 %v633
    %v780 = vunpack.c.l.b16 %v634
    %v781 = vunpack.c.h.b16 %v634
    %v782 = vunpack.c.l.b16 %v635
    %v783 = vunpack.c.h.b16 %v635
    %v784 = vunpack.c.l.b16 %v636
    %v785 = vunpack.c.h.b16 %v636
    %v786 = vunpack.c.l.b16 %v637
    %v787 = vunpack.c.h.b16 %v637
    %v788 = vpack.c.b16 %v694, %v692
    %v789 = vpack.c.b16 %v695, %v693
    %v790 = vpack.c.b16 %v698, %v696
    %v791 = vpack.c.b16 %v699, %v697
    %v792 = vpack.c.b16 %v702, %v700
    %v793 = vpack.c.b16 %v703, %v701
    %v794 = vpack.c.b16 %v706, %v704
    %v795 = vpack.c.b16 %v707, %v705
    %v796 = vpack.c.b16 %v710, %v708
    %v797 = vpack.c.b16 %v711, %v709
    %v798 = vpack.c.b16 %v714, %v712
    %v799 = vpack.c.b16 %v715, %v713
    %v800 = vpack.c.b16 %v718, %v716
    %v801 = vpack.c.b16 %v719, %v717
    %v802 = vpack.c.b16 %v722, %v720
    %v803 = vpack.c.b16 %v723, %v721
    %v804 = vpack.c.b16 %v726, %v724
    %v805 = vpack.c.b16 %v727, %v725
    %v806 = vpack.c.b16 %v730, %v728
    %v807 = vpack.c.b16 %v731, %v729
    %v808 = vpack.c.b16 %v734, %v732
    %v809 = vpack.c.b16 %v735, %v733
    %v810 = vpack.c.b16 %v738, %v736
    %v811 = vpack.c.b16 %v739, %v737
    %v812 = vpack.c.b16 %v742, %v740
    %v813 = vpack.c.b16 %v743, %v741
    %v814 = vpack.c.b16 %v746, %v744
    %v815 = vpack.c.b16 %v747, %v745
    %v816 = vpack.c.b16 %v750, %v748
    %v817 = vpack.c.b16 %v751, %v749
    %v818 = vpack.c.b16 %v754, %v752
    %v819 = vpack.c.b16 %v755, %v753
    %v820 = vpack.c.b16 %v758, %v756
    %v821 = vpack.c.b16 %v759, %v757
    %v822 = vpack.c.b16 %v762, %v760
    %v823 = vpack.c.b16 %v763, %v761
    %v824 = vpack.c.b16 %v766, %v764
    %v825 = vpack.c.b16 %v767, %v765
    %v826 = vpack.c.b16 %v770, %v768
    %v827 = vpack.c.b16 %v771, %v769
    %v828 = vpack.c.b16 %v774, %v772
    %v829 = vpack.c.b16 %v775, %v773
    %v830 = vpack.c.b16 %v778, %v776
    %v831 = vpack.c.b16 %v779, %v777
    %v832 = vpack.c.b16 %v782, %v780
    %v833 = vpack.c.b16 %v783, %v781
    %v834 = vpack.c.b16 %v786, %v784
    %v835 = vpack.c.b16 %v787, %v785
    %884 = vmatpush.bf16.msra.mxu0 %v802
    %885 = vmatpush.bf16.msra.mxu0 %v800
    %886 = vmatpush.bf16.msra.mxu0 %v798
    %887 = vmatpush.bf16.msra.mxu0 %v796
    %888 = vmatpush.bf16.msra.mxu0 %v794
    %889 = vmatpush.bf16.msra.mxu0 %v792
    %890 = vmatpush.bf16.msra.mxu0 %v790
    %891 = vmatpush.bf16.msra.mxu0 %v788
    %892 = vmatmul.bf16.gmra.mxu0 %v587
    %v893 = vpop.f32.mrf.mxu0
    %v894 = vadd.f32 %v640, %v893
    %v895 = vpop.f32.mrf.mxu0
    %896 = vdwg.mxu0
    %897 = vmatpush.bf16.msra.mxu0 %v818
    %898 = vmatpush.bf16.msra.mxu0 %v816
    %899 = vmatpush.bf16.msra.mxu0 %v814
    %900 = vmatpush.bf16.msra.mxu0 %v812
    %901 = vmatpush.bf16.msra.mxu0 %v810
    %902 = vmatpush.bf16.msra.mxu0 %v808
    %903 = vmatpush.bf16.msra.mxu0 %v806
    %904 = vmatpush.bf16.msra.mxu0 %v804
    %905 = vmatmul.bf16.gmra.mxu0 %v588
    %v906 = vpop.f32.mrf.mxu0
    %v907 = vadd.f32 %v894, %v906
    %v908 = vpop.f32.mrf.mxu0
    %909 = vdwg.mxu0
    %910 = vmatpush.bf16.msra.mxu0 %v834
    %911 = vmatpush.bf16.msra.mxu0 %v832
    %912 = vmatpush.bf16.msra.mxu0 %v830
    %913 = vmatpush.bf16.msra.mxu0 %v828
    %914 = vmatpush.bf16.msra.mxu0 %v826
    %915 = vmatpush.bf16.msra.mxu0 %v824
    %916 = vmatpush.bf16.msra.mxu0 %v822
    %917 = vmatpush.bf16.msra.mxu0 %v820
    %918 = vmatmul.bf16.gmra.mxu0 %v589
    %v919 = vpop.f32.mrf.mxu0
    %v920 = vadd.f32 %v907, %v919
    %v921 = vpop.f32.mrf.mxu0
    %922 = vdwg.mxu0
    %923 = vmatpush.bf16.msra.mxu0 %v803
    %924 = vmatpush.bf16.msra.mxu0 %v801
    %925 = vmatpush.bf16.msra.mxu0 %v799
    %926 = vmatpush.bf16.msra.mxu0 %v797
    %927 = vmatpush.bf16.msra.mxu0 %v795
    %928 = vmatpush.bf16.msra.mxu0 %v793
    %929 = vmatpush.bf16.msra.mxu0 %v791
    %930 = vmatpush.bf16.msra.mxu0 %v789
    %931 = vmatmul.bf16.gmra.mxu0 %v587
    %v932 = vpop.f32.mrf.mxu0
    %v933 = vadd.f32 %v641, %v932
    %v934 = vpop.f32.mrf.mxu0
    %935 = vdwg.mxu0
    %936 = vmatpush.bf16.msra.mxu0 %v819
    %937 = vmatpush.bf16.msra.mxu0 %v817
    %938 = vmatpush.bf16.msra.mxu0 %v815
    %939 = vmatpush.bf16.msra.mxu0 %v813
    %940 = vmatpush.bf16.msra.mxu0 %v811
    %941 = vmatpush.bf16.msra.mxu0 %v809
    %942 = vmatpush.bf16.msra.mxu0 %v807
    %943 = vmatpush.bf16.msra.mxu0 %v805
    %944 = vmatmul.bf16.gmra.mxu0 %v588
    %v945 = vpop.f32.mrf.mxu0
    %v946 = vadd.f32 %v933, %v945
    %v947 = vpop.f32.mrf.mxu0
    %948 = vdwg.mxu0
    %949 = vmatpush.bf16.msra.mxu0 %v835
    %950 = vmatpush.bf16.msra.mxu0 %v833
    %951 = vmatpush.bf16.msra.mxu0 %v831
    %952 = vmatpush.bf16.msra.mxu0 %v829
    %953 = vmatpush.bf16.msra.mxu0 %v827
    %954 = vmatpush.bf16.msra.mxu0 %v825
    %955 = vmatpush.bf16.msra.mxu0 %v823
    %956 = vmatpush.bf16.msra.mxu0 %v821
    %957 = vmatmul.bf16.gmra.mxu0 %v589
    %v958 = vpop.f32.mrf.mxu0
    %v959 = vadd.f32 %v946, %v958
    %v960 = vpop.f32.mrf.mxu0
    %961 = vdwg.mxu0
    %v962 = vmax.f32 %v920, 0.0
    %v963 = vmax.f32 %v959, 0.0
    %v964 = vpack.c.bf16 %v962, %v962
    %v965 = vpack.c.bf16 %v963, %v963
    %v966 = vld [vmem:[#allocation11] sm:$0xf]
    %v967 = vld [vmem:[#allocation11 + $0x4] sm:$0xf]
    %v968 = vld [vmem:[#allocation11 + $0x8] sm:$0xf]
    %v969 = vld [vmem:[#allocation11 + $0xc] sm:$0xf]
    %v970 = vld [vmem:[#allocation11 + $0x10] sm:$0xf]
    %v971 = vld [vmem:[#allocation11 + $0x14] sm:$0xf]
    %v972 = vld [vmem:[#allocation11 + $0x18] sm:$0xf]
    %v973 = vld [vmem:[#allocation11 + $0x1c] sm:$0xf]
    %v974 = vld [vmem:[#allocation11 + $0x20] sm:$0xf]
    %v975 = vld [vmem:[#allocation11 + $0x24] sm:$0xf]
    %v976 = vld [vmem:[#allocation11 + $0x28] sm:$0xf]
    %v977 = vld [vmem:[#allocation11 + $0x2c] sm:$0xf]
    %v978 = vld [vmem:[#allocation11 + $0x30] sm:$0xf]
    %v979 = vld [vmem:[#allocation11 + $0x34] sm:$0xf]
    %v980 = vld [vmem:[#allocation11 + $0x38] sm:$0xf]
    %v981 = vld [vmem:[#allocation11 + $0x3c] sm:$0xf]
    %v982 = vld [vmem:[#allocation11 + $0x40] sm:$0xf]
    %v983 = vld [vmem:[#allocation11 + $0x44] sm:$0xf]
    %v984 = vld [vmem:[#allocation11 + $0x48] sm:$0xf]
    %v985 = vld [vmem:[#allocation11 + $0x4c] sm:$0xf]
    %v986 = vld [vmem:[#allocation11 + $0x50] sm:$0xf]
    %v987 = vld [vmem:[#allocation11 + $0x54] sm:$0xf]
    %v988 = vld [vmem:[#allocation11 + $0x58] sm:$0xf]
    %v989 = vld [vmem:[#allocation11 + $0x5c] sm:$0xf]
    %v990 = vld [vmem:[#allocation11 + $0x60] sm:$0xf]
    %v991 = vld [vmem:[#allocation11 + $0x64] sm:$0xf]
    %v992 = vld [vmem:[#allocation11 + $0x68] sm:$0xf]
    %v993 = vld [vmem:[#allocation11 + $0x6c] sm:$0xf]
    %v994 = vld [vmem:[#allocation11 + $0x70] sm:$0xf]
    %v995 = vld [vmem:[#allocation11 + $0x74] sm:$0xf]
    %v996 = vld [vmem:[#allocation11 + $0x78] sm:$0xf]
    %v997 = vld [vmem:[#allocation11 + $0x7c] sm:$0xf]
    %v998 = vld [vmem:[%s8] sm:$0x1]
    %v1000 = vperm.slane %v998, 0
    %v1034 = vunpack.c.l.b16 %v966
    %v1035 = vunpack.c.l.b16 %v967
    %v1036 = vunpack.c.l.b16 %v968
    %v1037 = vunpack.c.l.b16 %v969
    %v1038 = vunpack.c.l.b16 %v970
    %v1039 = vunpack.c.l.b16 %v971
    %v1040 = vunpack.c.l.b16 %v972
    %v1041 = vunpack.c.l.b16 %v973
    %v1042 = vunpack.c.l.b16 %v974
    %v1043 = vunpack.c.l.b16 %v975
    %v1044 = vunpack.c.l.b16 %v976
    %v1045 = vunpack.c.l.b16 %v977
    %v1046 = vunpack.c.l.b16 %v978
    %v1047 = vunpack.c.l.b16 %v979
    %v1048 = vunpack.c.l.b16 %v980
    %v1049 = vunpack.c.l.b16 %v981
    %v1050 = vunpack.c.l.b16 %v982
    %v1051 = vunpack.c.l.b16 %v983
    %v1052 = vunpack.c.l.b16 %v984
    %v1053 = vunpack.c.l.b16 %v985
    %v1054 = vunpack.c.l.b16 %v986
    %v1055 = vunpack.c.l.b16 %v987
    %v1056 = vunpack.c.l.b16 %v988
    %v1057 = vunpack.c.l.b16 %v989
    %v1058 = vunpack.c.l.b16 %v990
    %v1059 = vunpack.c.l.b16 %v991
    %v1060 = vunpack.c.l.b16 %v992
    %v1061 = vunpack.c.l.b16 %v993
    %v1062 = vunpack.c.l.b16 %v994
    %v1063 = vunpack.c.l.b16 %v995
    %v1064 = vunpack.c.l.b16 %v996
    %v1065 = vunpack.c.l.b16 %v997
    %v1066 = vpack.c.b16 %v1035, %v1034
    %v1067 = vpack.c.b16 %v1037, %v1036
    %v1068 = vpack.c.b16 %v1039, %v1038
    %v1069 = vpack.c.b16 %v1041, %v1040
    %v1070 = vpack.c.b16 %v1043, %v1042
    %v1071 = vpack.c.b16 %v1045, %v1044
    %v1072 = vpack.c.b16 %v1047, %v1046
    %v1073 = vpack.c.b16 %v1049, %v1048
    %v1074 = vpack.c.b16 %v1051, %v1050
    %v1075 = vpack.c.b16 %v1053, %v1052
    %v1076 = vpack.c.b16 %v1055, %v1054
    %v1077 = vpack.c.b16 %v1057, %v1056
    %v1078 = vpack.c.b16 %v1059, %v1058
    %v1079 = vpack.c.b16 %v1061, %v1060
    %v1080 = vpack.c.b16 %v1063, %v1062
    %v1081 = vpack.c.b16 %v1065, %v1064
    %1098 = vmatpush.bf16.msra.mxu0 %v1073
    %1099 = vmatpush.bf16.msra.mxu0 %v1072
    %1100 = vmatpush.bf16.msra.mxu0 %v1071
    %1101 = vmatpush.bf16.msra.mxu0 %v1070
    %1102 = vmatpush.bf16.msra.mxu0 %v1069
    %1103 = vmatpush.bf16.msra.mxu0 %v1068
    %1104 = vmatpush.bf16.msra.mxu0 %v1067
    %1105 = vmatpush.bf16.msra.mxu0 %v1066
    %1106 = vmatmul.bf16.gmra.mxu0 %v964
    %v1107 = vpop.f32.mrf.mxu0
    %v1108 = vadd.f32 %v1000, %v1107
    %v1109 = vpop.f32.mrf.mxu0
    %1110 = vdwg.mxu0
    %1111 = vmatpush.bf16.msra.mxu0 %v1081
    %1112 = vmatpush.bf16.msra.mxu0 %v1080
    %1113 = vmatpush.bf16.msra.mxu0 %v1079
    %1114 = vmatpush.bf16.msra.mxu0 %v1078
    %1115 = vmatpush.bf16.msra.mxu0 %v1077
    %1116 = vmatpush.bf16.msra.mxu0 %v1076
    %1117 = vmatpush.bf16.msra.mxu0 %v1075
    %1118 = vmatpush.bf16.msra.mxu0 %v1074
    %1119 = vmatmul.bf16.gmra.mxu0 %v965
    %v1120 = vpop.f32.mrf.mxu0
    %v1121 = vadd.f32 %v1108, %v1120
    %v1122 = vpop.f32.mrf.mxu0
    %1123 = vdwg.mxu0
    %v1124 = vpack.c.bf16 %v1121, %v1121
    %1125 = vst [vmem:[#allocation13] sm:$0xf] %v1124
    // Predicated region
    $region62: #{tpu_custom_call.1} parent=1 // pred_check
      _
    $region63: #{tpu_custom_call.1} parent=1 // pred_check_branch
      %1127 = sbr.rel (0) target = $region65
    $region64: #{tpu_custom_call.1} parent=1 // pred_region
      %1129 = vsyncadd [#allocation4], 0
      %s1131 = sshll.u32 [#allocation13], 4
      %s1132 = int_to_ptr.vmem [resolvable:$true] %s1131
      %s1133 = sshll.u32 %s9, 4
      %s1134 = int_to_ptr.hbm [resolvable:$true] %s1133
      %1136 = dma.vmem_to_hbm [thread:$0]  %s1132, 64, %s1134, [#allocation4]
    $region65: #{tpu_custom_call.1} parent=1 // pred_fallthru
      _
    // Predicated region
    $region66: #{tpu_custom_call.1} parent=1 // pred_check
      _
    $region67: #{tpu_custom_call.1} parent=1 // pred_check_branch
      %1138 = sbr.rel (0) target = $region69
    $region68: #{tpu_custom_call.1} parent=1 // pred_region
      %1140 = dma.done [#allocation4], 64
    $region69: #{tpu_custom_call.1} parent=1 // pred_fallthru
      _
    %1141 = vsyncpa [#allocation3], 1
    %1142 = vsyncpa [#allocation6], 1
    %1143 = vsyncpa [#allocation9], 1
    %1144 = vsyncpa [#allocation12], 1
    %1145 = vsyncpa [#allocation4], 1

</llo_original>
